<compile_context>
chip_gen: v7x
topology: tpu7x:2x2x1
jax: 0.10.0
libtpu: 0.0.40
codegen_flags: <defaults>
</compile_context>

<pallas_src>
import functools

import jax
import jax.numpy as jnp
from jax.experimental import pallas as pl
from jax.experimental.pallas import tpu as pltpu


def _linear_relu_kernel(x_ref, w_ref, b_ref, o_ref, acc_ref, *, compute_dtype):
    # x_ref: (tm, tk)   w_ref: (tn, tk)  [PyTorch (dim_out, dim_in) layout]
    # b_ref: (1, tn)    o_ref: (tm, tn)  acc_ref: (tm, tn) f32 scratch
    k = pl.program_id(2)

    @pl.when(k == 0)
    def _():
        acc_ref[...] = jnp.zeros_like(acc_ref)

    # Contract x's dim 1 with w's dim 1 (i.e. x @ W^T) directly on the MXU;
    # cast inputs to bf16 for v6e/v7x MXU throughput, accumulate in f32.
    acc_ref[...] += jax.lax.dot_general(
        x_ref[...].astype(compute_dtype),
        w_ref[...].astype(compute_dtype),
        dimension_numbers=(((1,), (1,)), ((), ())),
        preferred_element_type=jnp.float32,
    )

    @pl.when(k == pl.num_programs(2) - 1)
    def _():
        out = acc_ref[...] + b_ref[...].astype(jnp.float32)
        o_ref[...] = jnp.maximum(out, 0.0).astype(o_ref.dtype)


def _round_up(x, m):
    return pl.cdiv(x, m) * m


def basic_block(x, weight, bias=None, *, tm=256, tn=512, tk=512,
                compute_dtype=jnp.bfloat16):
    """Pallas equivalent of BasicBlock.forward: ReLU(x @ W^T + b).

    x:      (M, dim_in)            float32
    weight: (dim_out, dim_in)      PyTorch nn.Linear layout (no transpose needed)
    bias:   (dim_out,) or None
    """
    M, K = x.shape
    N, K2 = weight.shape
    assert K == K2, "weight must be (dim_out, dim_in)"

    # Clamp tiles for small problems while keeping (8, 128) alignment.
    tm = int(min(tm, _round_up(M, 8)))
    tn = int(min(tn, _round_up(N, 128)))
    tk = int(min(tk, _round_up(K, 128)))

    # Pad to tile multiples (masked tail handled by zero-padding + final slice).
    M_pad = int(_round_up(M, tm))
    N_pad = int(_round_up(N, tn))
    K_pad = int(_round_up(K, tk))

    x_p = x if (M_pad == M and K_pad == K) else jnp.pad(
        x, ((0, M_pad - M), (0, K_pad - K)))
    w_p = weight if (N_pad == N and K_pad == K) else jnp.pad(
        weight, ((0, N_pad - N), (0, K_pad - K)))
    if bias is None:
        b_p = jnp.zeros((1, N_pad), x.dtype)
    else:
        b_1d = bias if N_pad == N else jnp.pad(bias, (0, N_pad - N))
        b_p = b_1d.reshape(1, N_pad)

    grid = (M_pad // tm, N_pad // tn, K_pad // tk)

    kernel = functools.partial(_linear_relu_kernel, compute_dtype=compute_dtype)

    out = pl.pallas_call(
        kernel,
        out_shape=jax.ShapeDtypeStruct((M_pad, N_pad), x.dtype),
        grid_spec=pltpu.PrefetchScalarGridSpec(
            num_scalar_prefetch=0,
            grid=grid,
            in_specs=[
                pl.BlockSpec((tm, tk), lambda i, j, k: (i, k)),   # x row/K tile
                pl.BlockSpec((tn, tk), lambda i, j, k: (j, k)),   # weight (N,K) tile
                pl.BlockSpec((1, tn), lambda i, j, k: (0, j)),    # bias tile
            ],
            out_specs=pl.BlockSpec((tm, tn), lambda i, j, k: (i, j)),
            scratch_shapes=[pltpu.VMEM((tm, tn), jnp.float32)],   # K accumulator
        ),
        compiler_params=pltpu.CompilerParams(
            dimension_semantics=("parallel", "parallel", "arbitrary"),
            vmem_limit_bytes=48 * 1024 * 1024,
        ),
    )(x_p, w_p, b_p)

    return out[:M, :N]


if __name__ == "__main__":
    key = jax.random.PRNGKey(0)
    k_x, k_w, k_b = jax.random.split(key, 3)

    batch, dim_in, dim_out = 8, 32, 64

    # Deterministic parameter init (matches PyTorch Linear init ranges).
    bound = 1.0 / (dim_in ** 0.5)
    weight = jax.random.uniform(k_w, (dim_out, dim_in), jnp.float32, -bound, bound)
    bias = jax.random.uniform(k_b, (dim_out,), jnp.float32, -bound, bound)
    x = jax.random.normal(k_x, (batch, dim_in), jnp.float32)

    ref = jnp.maximum(x @ weight.T + bias, 0.0)

    # Default path: bf16 MXU inputs, f32 accumulation (v6e/v7x fast path).
    out_bf16 = jax.block_until_ready(basic_block(x, weight, bias))
    assert out_bf16.shape == (batch, dim_out)
    assert jnp.allclose(out_bf16, ref, atol=5e-2, rtol=5e-2), "bf16 path mismatch"

    # Full-f32 compute path: exactness check against the reference.
    out_f32 = jax.block_until_ready(
        basic_block(x, weight, bias, compute_dtype=jnp.float32))
    assert jnp.allclose(out_f32, ref, atol=1e-5, rtol=1e-5), "f32 path mismatch"

    print("KERNEL_OK")
</pallas_src>

<mosaic_0001>
module attributes {stable_mosaic.version = 11 : i64} {
  func.func @_linear_relu_kernel(%arg0: i32, %arg1: i32, %arg2: i32, %arg3: memref<8x128xf32, #tpu.memory_space<vmem>>, %arg4: memref<128x128xf32, #tpu.memory_space<vmem>>, %arg5: memref<1x128xf32, #tpu.memory_space<vmem>>, %arg6: memref<8x128xf32, #tpu.memory_space<vmem>>, %arg7: memref<8x128xf32, #tpu.memory_space<vmem>>) attributes {dimension_semantics = [#tpu.dimension_semantics<parallel>, #tpu.dimension_semantics<parallel>, #tpu.dimension_semantics<arbitrary>], iteration_bounds = array<i64: 1, 1, 1>, scalar_prefetch = 0 : i64, scratch_operands = 1 : i64, tpu.core_type = #tpu.core_type<tc>, window_params = [{transform_indices = @transform_0, window_bounds = array<i64: 8, 128>}, {transform_indices = @transform_1, window_bounds = array<i64: 128, 128>}, {transform_indices = @transform_2, window_bounds = array<i64: 1, 128>}, {transform_indices = @transform_3, window_bounds = array<i64: 8, 128>}]} {
    %c0_i32 = arith.constant 0 : i32
    %0 = arith.cmpi eq, %arg2, %c0_i32 : i32
    %1 = arith.extui %0 : i1 to i32
    %c0_i32_0 = arith.constant 0 : i32
    %2 = arith.cmpi ne, %1, %c0_i32_0 : i32
    scf.if %2 {
      %cst_10 = arith.constant 0.000000e+00 : f32
      %14 = vector.broadcast %cst_10 : f32 to vector<8x128xf32>
      %c0_11 = arith.constant 0 : index
      %c0_12 = arith.constant 0 : index
      %15 = vector.load %arg7[%c0_11, %c0_12] : memref<8x128xf32, #tpu.memory_space<vmem>>, vector<8x128xf32>
      tpu.vector_store %arg7[%c0_11, %c0_12], %14 {strides = array<i32>} : memref<8x128xf32, #tpu.memory_space<vmem>>, vector<8x128xf32>,
    } else {
    }
    %c0 = arith.constant 0 : index
    %c0_1 = arith.constant 0 : index
    %3 = vector.load %arg7[%c0, %c0_1] : memref<8x128xf32, #tpu.memory_space<vmem>>, vector<8x128xf32>
    %c0_2 = arith.constant 0 : index
    %c0_3 = arith.constant 0 : index
    %4 = vector.load %arg3[%c0_2, %c0_3] : memref<8x128xf32, #tpu.memory_space<vmem>>, vector<8x128xf32>
    %5 = arith.truncf %4 : vector<8x128xf32> to vector<8x128xbf16>
    %c0_4 = arith.constant 0 : index
    %c0_5 = arith.constant 0 : index
    %6 = vector.load %arg4[%c0_4, %c0_5] : memref<128x128xf32, #tpu.memory_space<vmem>>, vector<128x128xf32>
    %7 = arith.truncf %6 : vector<128x128xf32> to vector<128x128xbf16>
    %cst = arith.constant dense<0.000000e+00> : vector<8x128xf32>
    %8 = tpu.matmul %5, %7, %cst {dimension_numbers = #tpu.dot_dimension_numbers<[1], [1], [0], [0], [0, 0, 1, 0], [], []>} : vector<8x128xbf16>, vector<128x128xbf16>, vector<8x128xf32> -> vector<8x128xf32>
    %9 = arith.addf %3, %8 : vector<8x128xf32>
    %c0_6 = arith.constant 0 : index
    %c0_7 = arith.constant 0 : index
    %10 = vector.load %arg7[%c0_6, %c0_7] : memref<8x128xf32, #tpu.memory_space<vmem>>, vector<8x128xf32>
    tpu.vector_store %arg7[%c0_6, %c0_7], %9 {strides = array<i32>} : memref<8x128xf32, #tpu.memory_space<vmem>>, vector<8x128xf32>,
    %c0_i32_8 = arith.constant 0 : i32
    %11 = arith.cmpi eq, %arg2, %c0_i32_8 : i32
    %12 = arith.extui %11 : i1 to i32
    %c0_i32_9 = arith.constant 0 : i32
    %13 = arith.cmpi ne, %12, %c0_i32_9 : i32
    scf.if %13 {
      %c0_10 = arith.constant 0 : index
      %c0_11 = arith.constant 0 : index
      %14 = vector.load %arg7[%c0_10, %c0_11] : memref<8x128xf32, #tpu.memory_space<vmem>>, vector<8x128xf32>
      %c0_12 = arith.constant 0 : index
      %c0_13 = arith.constant 0 : index
      %15 = vector.load %arg5[%c0_12, %c0_13] : memref<1x128xf32, #tpu.memory_space<vmem>>, vector<1x128xf32>
      %16 = vector.broadcast %15 : vector<1x128xf32> to vector<8x128xf32>
      %17 = arith.addf %14, %16 : vector<8x128xf32>
      %cst_14 = arith.constant 0.000000e+00 : f32
      %18 = vector.broadcast %cst_14 : f32 to vector<8x128xf32>
      %19 = arith.maximumf %17, %18 : vector<8x128xf32>
      %c0_15 = arith.constant 0 : index
      %c0_16 = arith.constant 0 : index
      %20 = vector.load %arg6[%c0_15, %c0_16] : memref<8x128xf32, #tpu.memory_space<vmem>>, vector<8x128xf32>
      tpu.vector_store %arg6[%c0_15, %c0_16], %19 {strides = array<i32>} : memref<8x128xf32, #tpu.memory_space<vmem>>, vector<8x128xf32>,
    } else {
    }
    return
  }
  func.func @transform_0(%arg0: i32, %arg1: i32, %arg2: i32) -> (i32, i32) {
    %c0_i32 = arith.constant 0 : i32
    return %arg0, %arg2 : i32, i32
  }
  func.func @transform_1(%arg0: i32, %arg1: i32, %arg2: i32) -> (i32, i32) {
    %c0_i32 = arith.constant 0 : i32
    return %arg1, %arg2 : i32, i32
  }
  func.func @transform_2(%arg0: i32, %arg1: i32, %arg2: i32) -> (i32, i32) {
    %c0_i32 = arith.constant 0 : i32
    %c0_i32_0 = arith.constant 0 : i32
    return %c0_i32, %arg1 : i32, i32
  }
  func.func @transform_3(%arg0: i32, %arg1: i32, %arg2: i32) -> (i32, i32) {
    %c0_i32 = arith.constant 0 : i32
    return %arg0, %arg1 : i32, i32
  }
}

</mosaic_0001>

<llo_original>
// kernel: tpu_custom_call.1
$region0: #{tpu_custom_call.1}
  #allocation0 [shape = 'u32[]', space=smem, size = 0x4, offset = 0x4, fixed_abs, tag = 'smem constant byte address 0x4 - core index']
  #allocation1 [shape = 'u32[144,128]{1,0:T(1,128)}', space=vmem, size = 0x12000, scoped, tag = 'internal scratch']
  #allocation2 [shape = 'f32[8,128]{1,0:T(8,128)}', space=vmem, size = 0x1000, scoped, tag = 'scratch operand']
  %s0 = inlined_call_operand.hbm [shape: f32[8,128], index: 0, kind: input, shape index: {}]
  %s1 = inlined_call_operand.hbm [shape: f32[128,128], index: 1, kind: input, shape index: {}]
  %s2 = inlined_call_operand.vmem [shape: f32[1,128], index: 2, kind: input, shape index: {}]
  %s3 = inlined_call_operand.hbm [shape: f32[8,128], index: 3, kind: output, shape index: {}]
  %s4 = sld [smem:[#allocation0]]
  $region38: #{tpu_custom_call.1} parent=0
    _
  %s6 = ssub.s32 1, %s4
  %s7 = scalar_select 0, %s6, %s4
  $region1: #{tpu_custom_call.1} parent=0
    #allocation3 [shape = 'u8[4096]{0}', space=vmem, size = 0x1000, scoped, tag = 'input window, operand 0, single buffered']
    #allocation4 [shape = 's32[1]{0}', space=sflag, size = 0x4, scoped, tag = 'scoped memory for tpu_custom_call.1']
    #allocation5 [shape = 's32[1]{0}', space=sflag, size = 0x4, scoped, tag = 'scoped memory for tpu_custom_call.1']
    #allocation6 [shape = 'u8[65536]{0}', space=vmem, size = 0x10000, scoped, tag = 'input window, operand 1, single buffered']
    #allocation7 [shape = 's32[1]{0}', space=sflag, size = 0x4, scoped, tag = 'scoped memory for tpu_custom_call.1']
    #allocation8 [shape = 'u8[4096]{0}', space=vmem, size = 0x1000, scoped, tag = 'output window, operand 0, single buffered']
    %8 = vsyncpa [#allocation4], 0
    %9 = vsyncpa [#allocation7], 0
    %10 = vsyncpa [#allocation5], 0
    // Predicated region
    $region2: #{tpu_custom_call.1} parent=1 // pred_check
      _
    $region3: #{tpu_custom_call.1} parent=1 // pred_check_branch
      %12 = sbr.rel (0) target = $region5
    $region4: #{tpu_custom_call.1} parent=1 // pred_region
      %s14 = ssub.s32 128, 128
      %15 = vsyncadd [#allocation4], %s14
      %s17 = sshll.u32 [#allocation3], 4
      %s18 = int_to_ptr.vmem [resolvable:$true] %s17
      %20 = dma.hbm_to_vmem [thread:$0]  %s0, 128, %s18, [#allocation4]
    $region5: #{tpu_custom_call.1} parent=1 // pred_fallthru
      _
    // Predicated region
    $region6: #{tpu_custom_call.1} parent=1 // pred_check
      _
    $region7: #{tpu_custom_call.1} parent=1 // pred_check_branch
      %22 = sbr.rel (0) target = $region9
    $region8: #{tpu_custom_call.1} parent=1 // pred_region
      %s24 = ssub.s32 2048, 2048
      %25 = vsyncadd [#allocation7], %s24
      %s26 = sshll.u32 [#allocation6], 4
      %s27 = int_to_ptr.vmem [resolvable:$true] %s26
      %32 = dma.hbm_to_vmem [thread:$0]  %s1, 2048, %s27, [#allocation7], 128, 128, 8
    $region9: #{tpu_custom_call.1} parent=1 // pred_fallthru
      _
    // Predicated region
    $region10: #{tpu_custom_call.1} parent=1 // pred_check
      _
    $region11: #{tpu_custom_call.1} parent=1 // pred_check_branch
      %34 = sbr.rel (0) target = $region13
    $region12: #{tpu_custom_call.1} parent=1 // pred_region
      _
    $region13: #{tpu_custom_call.1} parent=1 // pred_fallthru
      _
    // Predicated region
    $region14: #{tpu_custom_call.1} parent=1 // pred_check
      _
    $region15: #{tpu_custom_call.1} parent=1 // pred_check_branch
      %36 = sbr.rel (0) target = $region17
    $region16: #{tpu_custom_call.1} parent=1 // pred_region
      %37 = dma.done [#allocation4], 128
    $region17: #{tpu_custom_call.1} parent=1 // pred_fallthru
      _
    // Predicated region
    $region18: #{tpu_custom_call.1} parent=1 // pred_check
      _
    $region19: #{tpu_custom_call.1} parent=1 // pred_check_branch
      %39 = sbr.rel (0) target = $region21
    $region20: #{tpu_custom_call.1} parent=1 // pred_region
      %40 = dma.done [#allocation7], 2048
    $region21: #{tpu_custom_call.1} parent=1 // pred_fallthru
      _
    %p42 = scmp.eq.s32.totalorder 0, 0
    // Predicated region
    $region22: #{tpu_custom_call.1} parent=1 // pred_check
      %p43 = pneg %p42
    $region23: #{tpu_custom_call.1} parent=1 // pred_check_branch
      %45 = sbr.rel (%p43) target = $region25
    $region24: #{tpu_custom_call.1} parent=1 // pred_region
      %46 = vst [vmem:[#allocation2] sm:$0xff] 0.0
    $region25: #{tpu_custom_call.1} parent=1 // pred_fallthru
      _
    %v47 = vld [vmem:[#allocation2] sm:$0xff]
    %v48 = vld [vmem:[#allocation3] sm:$0xff]
    %v49 = vpack.c.bf16 %v48, %v48
    %v50 = vld [vmem:[#allocation6] sm:$0xff]
    %v51 = vld [vmem:[#allocation6 + $0x8] sm:$0xff]
    %v52 = vld [vmem:[#allocation6 + $0x10] sm:$0xff]
    %v53 = vld [vmem:[#allocation6 + $0x18] sm:$0xff]
    %v54 = vld [vmem:[#allocation6 + $0x20] sm:$0xff]
    %v55 = vld [vmem:[#allocation6 + $0x28] sm:$0xff]
    %v56 = vld [vmem:[#allocation6 + $0x30] sm:$0xff]
    %v57 = vld [vmem:[#allocation6 + $0x38] sm:$0xff]
    %v58 = vld [vmem:[#allocation6 + $0x40] sm:$0xff]
    %v59 = vld [vmem:[#allocation6 + $0x48] sm:$0xff]
    %v60 = vld [vmem:[#allocation6 + $0x50] sm:$0xff]
    %v61 = vld [vmem:[#allocation6 + $0x58] sm:$0xff]
    %v62 = vld [vmem:[#allocation6 + $0x60] sm:$0xff]
    %v63 = vld [vmem:[#allocation6 + $0x68] sm:$0xff]
    %v64 = vld [vmem:[#allocation6 + $0x70] sm:$0xff]
    %v65 = vld [vmem:[#allocation6 + $0x78] sm:$0xff]
    %v66 = vpack.c.bf16 %v51, %v50
    %v67 = vpack.c.bf16 %v53, %v52
    %v68 = vpack.c.bf16 %v55, %v54
    %v69 = vpack.c.bf16 %v57, %v56
    %v70 = vpack.c.bf16 %v59, %v58
    %v71 = vpack.c.bf16 %v61, %v60
    %v72 = vpack.c.bf16 %v63, %v62
    %v73 = vpack.c.bf16 %v65, %v64
    %74 = vmatprep.subr.bf16.mxu0 0
    %75 = vmatpush1.bf16.xpose.msra.mxu0 %v66
    %76 = vmatprep.subr.bf16.mxu0 0
    %77 = vmatpush1.bf16.xpose.msra.mxu0 %v67
    %78 = vmatprep.subr.bf16.mxu0 0
    %79 = vmatpush1.bf16.xpose.msra.mxu0 %v68
    %80 = vmatprep.subr.bf16.mxu0 0
    %81 = vmatpush1.bf16.xpose.msra.mxu0 %v69
    %82 = vmatprep.subr.bf16.mxu0 0
    %83 = vmatpush1.bf16.xpose.msra.mxu0 %v70
    %84 = vmatprep.subr.bf16.mxu0 0
    %85 = vmatpush1.bf16.xpose.msra.mxu0 %v71
    %86 = vmatprep.subr.bf16.mxu0 0
    %87 = vmatpush1.bf16.xpose.msra.mxu0 %v72
    %88 = vmatprep.subr.bf16.mxu0 0
    %89 = vmatpush1.bf16.xpose.msra.mxu0 %v73
    %90 = vmatprep.subr.bf16.mxu0 0
    %91 = vmatpush1.bf16.xpose.msra.mxu0 0
    %92 = vmatprep.subr.bf16.mxu0 0
    %93 = vmatpush1.bf16.xpose.msra.mxu0 0
    %94 = vmatprep.subr.bf16.mxu0 0
    %95 = vmatpush1.bf16.xpose.msra.mxu0 0
    %96 = vmatprep.subr.bf16.mxu0 0
    %97 = vmatpush1.bf16.xpose.msra.mxu0 0
    %98 = vmatprep.subr.bf16.mxu0 0
    %99 = vmatpush1.bf16.xpose.msra.mxu0 0
    %100 = vmatprep.subr.bf16.mxu0 0
    %101 = vmatpush1.bf16.xpose.msra.mxu0 0
    %102 = vmatprep.subr.bf16.mxu0 0
    %103 = vmatpush1.bf16.xpose.msra.mxu0 0
    %104 = vmatprep.subr.bf16.mxu0 0
    %105 = vmatpush1.bf16.xpose.msra.mxu0 0
    %106 = vmatprep.mubr.bf16.mxu0 0
    %107 = vmatmul.mubr.bf16.gmra.mrb[0].mxu0 %v49
    %v108 = vpop.f32.mrb[0].mxu0
    %v109 = vadd.f32 0.0, %v108
    %v110 = vpop.f32.mrb[0].mxu0
    %v111 = vpop.f32.mrb[0].mxu0
    %v112 = vpop.f32.mrb[0].mxu0
    %113 = vdwg.mxu0
    %v114 = vadd.f32 %v47, %v109
    %115 = vst [vmem:[#allocation2] sm:$0xff] %v114
    // Predicated region
    $region26: #{tpu_custom_call.1} parent=1 // pred_check
      %p116 = pneg %p42
    $region27: #{tpu_custom_call.1} parent=1 // pred_check_branch
      %118 = sbr.rel (%p116) target = $region29
    $region28: #{tpu_custom_call.1} parent=1 // pred_region
      %v119 = vld [vmem:[#allocation2] sm:$0xff]
      %v120 = vld [vmem:[%s2] sm:$0x1]
      %v122 = vlaneseq
      %v123 = vshrl.u32 %v122, 7
      %v124 = vsub.s32 0, %v123
      %v125 = vrot.slane %v120, %v124
      %v127 = vadd.f32 %v119, %v125
      %v128 = vmax.f32 %v127, 0.0
      %129 = vst [vmem:[#allocation8] sm:$0xff] %v128
    $region29: #{tpu_custom_call.1} parent=1 // pred_fallthru
      _
    // Predicated region
    $region30: #{tpu_custom_call.1} parent=1 // pred_check
      _
    $region31: #{tpu_custom_call.1} parent=1 // pred_check_branch
      %131 = sbr.rel (0) target = $region33
    $region32: #{tpu_custom_call.1} parent=1 // pred_region
      %s133 = ssub.s32 128, 128
      %134 = vsyncadd [#allocation5], %s133
      %s136 = sshll.u32 [#allocation8], 4
      %s137 = int_to_ptr.vmem [resolvable:$true] %s136
      %139 = dma.vmem_to_hbm [thread:$0]  %s137, 128, %s3, [#allocation5]
    $region33: #{tpu_custom_call.1} parent=1 // pred_fallthru
      _
    // Predicated region
    $region34: #{tpu_custom_call.1} parent=1 // pred_check
      _
    $region35: #{tpu_custom_call.1} parent=1 // pred_check_branch
      %141 = sbr.rel (0) target = $region37
    $region36: #{tpu_custom_call.1} parent=1 // pred_region
      %142 = dma.done [#allocation5], 128
    $region37: #{tpu_custom_call.1} parent=1 // pred_fallthru
      _
    %143 = vsyncpa [#allocation4], 1
    %144 = vsyncpa [#allocation7], 1
    %145 = vsyncpa [#allocation5], 1

</llo_original>
